<compile_context>
chip_gen: v6e
topology: v6e:2x2x1
jax: 0.10.0
libtpu: 0.0.40
codegen_flags: <defaults>
</compile_context>

<pallas_src>
import jax
import jax.numpy as jnp
from jax.experimental import pallas as pl
from jax.experimental.pallas import tpu as pltpu


# ----------------------------------------------------------------------------
# Kernels
# ----------------------------------------------------------------------------
def _gate(x_f32, w1, b1, w2, b2):
    """Gate MLP: ReLU(x @ w1 + b1) @ w2 + b2 -> Sigmoid(.) * 2, f32 accumulate."""
    h = jnp.dot(x_f32, w1, preferred_element_type=jnp.float32) + b1
    h = jnp.maximum(h, 0.0)                                   # ReLU
    logits = jnp.dot(h, w2, preferred_element_type=jnp.float32) + b2
    return jax.nn.sigmoid(logits) * 2.0                       # Sigmoid * 2


def _fs_kernel_bcast(ctx1_ref, ctx2_ref, emb_ref,
                     w1a_ref, b1a_ref, w2a_ref, b2a_ref,
                     w1b_ref, b1b_ref, w2b_ref, b2b_ref,
                     f1_ref, f2_ref):
    """Default config (empty fs contexts): every gate-input row is the same
    ctx bias, so evaluate each gate once on a (1, E) row and broadcast the
    resulting (1, F) gate across the (TB, F) embedding tile."""
    gt1 = _gate(ctx1_ref[...].astype(jnp.float32),
                w1a_ref[...], b1a_ref[...], w2a_ref[...], b2a_ref[...])   # (1, F)
    gt2 = _gate(ctx2_ref[...].astype(jnp.float32),
                w1b_ref[...], b1b_ref[...], w2b_ref[...], b2b_ref[...])   # (1, F)

    emb = emb_ref[...]                         # keep the wide stream in native dtype
    f1_ref[...] = (emb * gt1.astype(emb.dtype)).astype(f1_ref.dtype)
    f2_ref[...] = (emb * gt2.astype(emb.dtype)).astype(f2_ref.dtype)


def _fs_kernel_per_row(fs1_ref, fs2_ref, emb_ref,
                       w1a_ref, b1a_ref, w2a_ref, b2a_ref,
                       w1b_ref, b1b_ref, w2b_ref, b2b_ref,
                       f1_ref, f2_ref):
    """General path (non-empty fs contexts): per-row gate inputs."""
    gt1 = _gate(fs1_ref[...].astype(jnp.float32),
                w1a_ref[...], b1a_ref[...], w2a_ref[...], b2a_ref[...])   # (TB, F)
    gt2 = _gate(fs2_ref[...].astype(jnp.float32),
                w1b_ref[...], b1b_ref[...], w2b_ref[...], b2b_ref[...])   # (TB, F)

    emb = emb_ref[...]
    f1_ref[...] = (emb * gt1.astype(emb.dtype)).astype(f1_ref.dtype)
    f2_ref[...] = (emb * gt2.astype(emb.dtype)).astype(f2_ref.dtype)


# ----------------------------------------------------------------------------
# Wrapper
# ----------------------------------------------------------------------------
def _round_up(x, m):
    return ((x + m - 1) // m) * m


def _vmem_budget_bytes(tb, E, H, F, emb_bytes, fs_bytes, per_row):
    """Rough double-buffered VMEM footprint for one grid step."""
    batched = tb * F * (3 * emb_bytes)                 # emb tile + 2 output tiles
    if per_row:
        batched += 2 * tb * E * fs_bytes               # per-row gate inputs
    weights = 2 * (E * H + H + H * F + F) * 4          # both gate MLPs (f32)
    ctx = 2 * E * 4
    return 2 * (batched + weights + ctx)               # x2 for double buffering


def feature_selection(flat_emb, params, fs1_input=None, fs2_input=None,
                      *, batch_tile=1024, interpret=False):
    """FedCRP FeatureSelection forward.

    flat_emb:            (B, F)
    fs1_input/fs2_input: optional (B, E) per-row gate inputs for the non-empty
                         fs{1,2}_context configuration. When None (the module's
                         default config) the gate input is the ctx bias
                         repeated over the batch, which the kernel exploits by
                         evaluating each gate exactly once per grid step.
    """
    B, F = flat_emb.shape
    E, H = params["w1a"].shape

    per_row = (fs1_input is not None) or (fs2_input is not None)
    if per_row:
        if fs1_input is None:
            fs1_input = jnp.broadcast_to(params["fs1_ctx_bias"], (B, E))
        if fs2_input is None:
            fs2_input = jnp.broadcast_to(params["fs2_ctx_bias"], (B, E))

    emb_bytes = jnp.dtype(flat_emb.dtype).itemsize
    fs_bytes = jnp.dtype(fs1_input.dtype).itemsize if per_row else 4

    # --- tile selection: as large as fits comfortably in v7x VMEM (64 MiB). ---
    vmem_cap = 56 << 20
    tb = min(_round_up(batch_tile, 8), _round_up(B, 8))
    while tb > 8 and _vmem_budget_bytes(tb, E, H, F, emb_bytes, fs_bytes,
                                        per_row) > vmem_cap:
        tb = _round_up(tb // 2, 8)

    bp = _round_up(B, tb)                 # pad batch to a tile multiple (no assert)
    budget = _vmem_budget_bytes(tb, E, H, F, emb_bytes, fs_bytes, per_row)
    vmem_limit = min(max(int(1.5 * budget) + (4 << 20), 16 << 20), 60 << 20)

    emb_p = flat_emb if bp == B else jnp.pad(flat_emb, ((0, bp - B), (0, 0)))

    def rep(shape):                        # grid-invariant (resident) operand
        return pl.BlockSpec(shape, lambda i: (0, 0))

    batched_F = pl.BlockSpec((tb, F), lambda i: (i, 0))

    w_specs = [rep((E, H)), rep((1, H)), rep((H, F)), rep((1, F)),
               rep((E, H)), rep((1, H)), rep((H, F)), rep((1, F))]
    wts = (params["w1a"], params["b1a"], params["w2a"], params["b2a"],
           params["w1b"], params["b1b"], params["w2b"], params["b2b"])

    if per_row:
        fs1_p = fs1_input if bp == B else jnp.pad(fs1_input, ((0, bp - B), (0, 0)))
        fs2_p = fs2_input if bp == B else jnp.pad(fs2_input, ((0, bp - B), (0, 0)))
        kernel = _fs_kernel_per_row
        gate_args = (fs1_p, fs2_p)
        gate_specs = [pl.BlockSpec((tb, E), lambda i: (i, 0)),
                      pl.BlockSpec((tb, E), lambda i: (i, 0))]
    else:
        kernel = _fs_kernel_bcast
        gate_args = (params["fs1_ctx_bias"], params["fs2_ctx_bias"])
        gate_specs = [rep((1, E)), rep((1, E))]

    out_shape = (jax.ShapeDtypeStruct((bp, F), flat_emb.dtype),
                 jax.ShapeDtypeStruct((bp, F), flat_emb.dtype))

    f1, f2 = pl.pallas_call(
        kernel,
        out_shape=out_shape,
        grid_spec=pltpu.PrefetchScalarGridSpec(
            num_scalar_prefetch=0,
            grid=(bp // tb,),
            in_specs=gate_specs + [batched_F] + w_specs,
            out_specs=[batched_F, batched_F],
        ),
        compiler_params=pltpu.CompilerParams(
            dimension_semantics=("parallel",),
            vmem_limit_bytes=vmem_limit,
        ),
        interpret=interpret,
    )(*gate_args, emb_p, *wts)

    if bp != B:
        f1 = f1[:B]
        f2 = f2[:B]
    return f1, f2


# ----------------------------------------------------------------------------
# Params / reference
# ----------------------------------------------------------------------------
def init_params(key, embedding_dim, hidden, feature_dim):
    """Deterministic synthetic init mirroring the PyTorch module's shapes."""
    ks = jax.random.split(key, 6)
    s1 = 1.0 / jnp.sqrt(embedding_dim)
    s2 = 1.0 / jnp.sqrt(hidden)
    return {
        # gate 1 MLP: embedding_dim -> hidden (ReLU) -> feature_dim (Sigmoid)
        "w1a": jax.random.normal(ks[0], (embedding_dim, hidden), jnp.float32) * s1,
        "b1a": jax.random.normal(ks[4], (1, hidden), jnp.float32) * 0.1,
        "w2a": jax.random.normal(ks[1], (hidden, feature_dim), jnp.float32) * s2,
        "b2a": jnp.zeros((1, feature_dim), jnp.float32),
        # gate 2 MLP
        "w1b": jax.random.normal(ks[2], (embedding_dim, hidden), jnp.float32) * s1,
        "b1b": jax.random.normal(ks[5], (1, hidden), jnp.float32) * 0.1,
        "w2b": jax.random.normal(ks[3], (hidden, feature_dim), jnp.float32) * s2,
        "b2b": jnp.zeros((1, feature_dim), jnp.float32),
        # fs{1,2}_ctx_bias (used when the context lists are empty)
        "fs1_ctx_bias": jnp.zeros((1, embedding_dim), jnp.float32),
        "fs2_ctx_bias": jnp.zeros((1, embedding_dim), jnp.float32),
    }


def reference(fs1_input, fs2_input, flat_emb, p):
    def gate(x, w1, b1, w2, b2):
        h = jnp.maximum(x @ w1 + b1, 0.0)
        return jax.nn.sigmoid(h @ w2 + b2) * 2.0
    gt1 = gate(fs1_input, p["w1a"], p["b1a"], p["w2a"], p["b2a"])
    gt2 = gate(fs2_input, p["w1b"], p["b1b"], p["w2b"], p["b2b"])
    return flat_emb * gt1, flat_emb * gt2


# TODO(synk): the non-empty fs{1,2}_context configuration requires the external
# FeatureEmbedding lookup (feature_map dependent); here the wrapper accepts the
# already-embedded per-row gate inputs instead of doing the lookup in-kernel.

if __name__ == "__main__":
    # Small shapes: batch=8, embedding_dim=32, hidden=32, num_fields=4
    # -> feature_dim = num_fields * embedding_dim = 128, flat_emb: (8, 128)
    B, E, H = 8, 32, 32
    num_fields = 4
    F = num_fields * E

    key = jax.random.PRNGKey(0)
    kp, ke, kf1, kf2, ke2 = jax.random.split(key, 5)
    params = init_params(kp, E, H, F)

    flat_emb = jax.random.normal(ke, (B, F), jnp.float32)

    # --- 1) default module config: empty contexts -> broadcast ctx-bias gate ---
    f1, f2 = feature_selection(flat_emb, params)
    jax.block_until_ready((f1, f2))
    fs1_b = jnp.broadcast_to(params["fs1_ctx_bias"], (B, E))
    fs2_b = jnp.broadcast_to(params["fs2_ctx_bias"], (B, E))
    r1, r2 = reference(fs1_b, fs2_b, flat_emb, params)
    assert jnp.allclose(f1, r1, atol=1e-5), "feature1 mismatch (broadcast path)"
    assert jnp.allclose(f2, r2, atol=1e-5), "feature2 mismatch (broadcast path)"

    # --- 2) general per-row gate inputs (non-empty context configuration) ---
    fs1_in = jax.random.normal(kf1, (B, E), jnp.float32)
    fs2_in = jax.random.normal(kf2, (B, E), jnp.float32)
    g1, g2 = feature_selection(flat_emb, params, fs1_in, fs2_in)
    jax.block_until_ready((g1, g2))
    q1, q2 = reference(fs1_in, fs2_in, flat_emb, params)
    assert jnp.allclose(g1, q1, atol=1e-5), "feature1 mismatch (per-row path)"
    assert jnp.allclose(g2, q2, atol=1e-5), "feature2 mismatch (per-row path)"

    # --- 3) non-divisible batch exercises the cdiv grid + padding path ---
    B2 = 300
    emb2 = jax.random.normal(ke2, (B2, F), jnp.float32)
    h1, h2 = feature_selection(emb2, params, batch_tile=128)
    jax.block_until_ready((h1, h2))
    fs1_b2 = jnp.broadcast_to(params["fs1_ctx_bias"], (B2, E))
    fs2_b2 = jnp.broadcast_to(params["fs2_ctx_bias"], (B2, E))
    s1, s2 = reference(fs1_b2, fs2_b2, emb2, params)
    assert h1.shape == (B2, F) and h2.shape == (B2, F)
    assert jnp.allclose(h1, s1, atol=1e-5), "feature1 mismatch (padded batch)"
    assert jnp.allclose(h2, s2, atol=1e-5), "feature2 mismatch (padded batch)"

    print("KERNEL_OK")
</pallas_src>

<mosaic_0001>
module attributes {stable_mosaic.version = 11 : i64} {
  func.func @_fs_kernel_bcast(%arg0: i32, %arg1: memref<1x32xf32, #tpu.memory_space<vmem>>, %arg2: memref<1x32xf32, #tpu.memory_space<vmem>>, %arg3: memref<8x128xf32, #tpu.memory_space<vmem>>, %arg4: memref<32x32xf32, #tpu.memory_space<vmem>>, %arg5: memref<1x32xf32, #tpu.memory_space<vmem>>, %arg6: memref<32x128xf32, #tpu.memory_space<vmem>>, %arg7: memref<1x128xf32, #tpu.memory_space<vmem>>, %arg8: memref<32x32xf32, #tpu.memory_space<vmem>>, %arg9: memref<1x32xf32, #tpu.memory_space<vmem>>, %arg10: memref<32x128xf32, #tpu.memory_space<vmem>>, %arg11: memref<1x128xf32, #tpu.memory_space<vmem>>, %arg12: memref<8x128xf32, #tpu.memory_space<vmem>>, %arg13: memref<8x128xf32, #tpu.memory_space<vmem>>) attributes {dimension_semantics = [#tpu.dimension_semantics<parallel>], iteration_bounds = array<i64: 1>, scalar_prefetch = 0 : i64, scratch_operands = 0 : i64, tpu.core_type = #tpu.core_type<tc>, window_params = [{pipeline_mode = #tpu.pipeline_mode<synchronous>, transform_indices = @transform_0, window_bounds = array<i64: 1, 32>}, {pipeline_mode = #tpu.pipeline_mode<synchronous>, transform_indices = @transform_1, window_bounds = array<i64: 1, 32>}, {transform_indices = @transform_2, window_bounds = array<i64: 8, 128>}, {pipeline_mode = #tpu.pipeline_mode<synchronous>, transform_indices = @transform_3, window_bounds = array<i64: 32, 32>}, {pipeline_mode = #tpu.pipeline_mode<synchronous>, transform_indices = @transform_4, window_bounds = array<i64: 1, 32>}, {pipeline_mode = #tpu.pipeline_mode<synchronous>, transform_indices = @transform_5, window_bounds = array<i64: 32, 128>}, {pipeline_mode = #tpu.pipeline_mode<synchronous>, transform_indices = @transform_6, window_bounds = array<i64: 1, 128>}, {pipeline_mode = #tpu.pipeline_mode<synchronous>, transform_indices = @transform_7, window_bounds = array<i64: 32, 32>}, {pipeline_mode = #tpu.pipeline_mode<synchronous>, transform_indices = @transform_8, window_bounds = array<i64: 1, 32>}, {pipeline_mode = #tpu.pipeline_mode<synchronous>, transform_indices = @transform_9, window_bounds = array<i64: 32, 128>}, {pipeline_mode = #tpu.pipeline_mode<synchronous>, transform_indices = @transform_10, window_bounds = array<i64: 1, 128>}, {transform_indices = @transform_11, window_bounds = array<i64: 8, 128>}, {transform_indices = @transform_12, window_bounds = array<i64: 8, 128>}]} {
    %c0 = arith.constant 0 : index
    %c0_0 = arith.constant 0 : index
    %0 = vector.load %arg1[%c0, %c0_0] : memref<1x32xf32, #tpu.memory_space<vmem>>, vector<1x32xf32>
    %c0_1 = arith.constant 0 : index
    %c0_2 = arith.constant 0 : index
    %1 = vector.load %arg4[%c0_1, %c0_2] : memref<32x32xf32, #tpu.memory_space<vmem>>, vector<32x32xf32>
    %c0_3 = arith.constant 0 : index
    %c0_4 = arith.constant 0 : index
    %2 = vector.load %arg5[%c0_3, %c0_4] : memref<1x32xf32, #tpu.memory_space<vmem>>, vector<1x32xf32>
    %c0_5 = arith.constant 0 : index
    %c0_6 = arith.constant 0 : index
    %3 = vector.load %arg6[%c0_5, %c0_6] : memref<32x128xf32, #tpu.memory_space<vmem>>, vector<32x128xf32>
    %c0_7 = arith.constant 0 : index
    %c0_8 = arith.constant 0 : index
    %4 = vector.load %arg7[%c0_7, %c0_8] : memref<1x128xf32, #tpu.memory_space<vmem>>, vector<1x128xf32>
    %cst = arith.constant dense<0.000000e+00> : vector<1x32xf32>
    %5 = tpu.matmul %0, %1, %cst {dimension_numbers = #tpu.dot_dimension_numbers<[1], [0], [0], [1], [0, 0, 1, 1], [], []>} : vector<1x32xf32>, vector<32x32xf32>, vector<1x32xf32> -> vector<1x32xf32>
    %6 = arith.addf %5, %2 : vector<1x32xf32>
    %cst_9 = arith.constant 0.000000e+00 : f32
    %7 = vector.broadcast %cst_9 : f32 to vector<1x32xf32>
    %8 = arith.maximumf %6, %7 : vector<1x32xf32>
    %cst_10 = arith.constant dense<0.000000e+00> : vector<1x128xf32>
    %9 = tpu.matmul %8, %3, %cst_10 {dimension_numbers = #tpu.dot_dimension_numbers<[1], [0], [0], [1], [0, 0, 1, 1], [], []>} : vector<1x32xf32>, vector<32x128xf32>, vector<1x128xf32> -> vector<1x128xf32>
    %10 = arith.addf %9, %4 : vector<1x128xf32>
    %11 = arith.negf %10 : vector<1x128xf32>
    %12 = math.exp %11 : vector<1x128xf32>
    %cst_11 = arith.constant 1.000000e+00 : f32
    %13 = vector.broadcast %cst_11 : f32 to vector<1x128xf32>
    %14 = arith.addf %13, %12 : vector<1x128xf32>
    %15 = arith.divf %13, %14 : vector<1x128xf32>
    %cst_12 = arith.constant 2.000000e+00 : f32
    %16 = vector.broadcast %cst_12 : f32 to vector<1x128xf32>
    %17 = arith.mulf %15, %16 : vector<1x128xf32>
    %c0_13 = arith.constant 0 : index
    %c0_14 = arith.constant 0 : index
    %18 = vector.load %arg2[%c0_13, %c0_14] : memref<1x32xf32, #tpu.memory_space<vmem>>, vector<1x32xf32>
    %c0_15 = arith.constant 0 : index
    %c0_16 = arith.constant 0 : index
    %19 = vector.load %arg8[%c0_15, %c0_16] : memref<32x32xf32, #tpu.memory_space<vmem>>, vector<32x32xf32>
    %c0_17 = arith.constant 0 : index
    %c0_18 = arith.constant 0 : index
    %20 = vector.load %arg9[%c0_17, %c0_18] : memref<1x32xf32, #tpu.memory_space<vmem>>, vector<1x32xf32>
    %c0_19 = arith.constant 0 : index
    %c0_20 = arith.constant 0 : index
    %21 = vector.load %arg10[%c0_19, %c0_20] : memref<32x128xf32, #tpu.memory_space<vmem>>, vector<32x128xf32>
    %c0_21 = arith.constant 0 : index
    %c0_22 = arith.constant 0 : index
    %22 = vector.load %arg11[%c0_21, %c0_22] : memref<1x128xf32, #tpu.memory_space<vmem>>, vector<1x128xf32>
    %cst_23 = arith.constant dense<0.000000e+00> : vector<1x32xf32>
    %23 = tpu.matmul %18, %19, %cst_23 {dimension_numbers = #tpu.dot_dimension_numbers<[1], [0], [0], [1], [0, 0, 1, 1], [], []>} : vector<1x32xf32>, vector<32x32xf32>, vector<1x32xf32> -> vector<1x32xf32>
    %24 = arith.addf %23, %20 : vector<1x32xf32>
    %cst_24 = arith.constant 0.000000e+00 : f32
    %25 = vector.broadcast %cst_24 : f32 to vector<1x32xf32>
    %26 = arith.maximumf %24, %25 : vector<1x32xf32>
    %cst_25 = arith.constant dense<0.000000e+00> : vector<1x128xf32>
    %27 = tpu.matmul %26, %21, %cst_25 {dimension_numbers = #tpu.dot_dimension_numbers<[1], [0], [0], [1], [0, 0, 1, 1], [], []>} : vector<1x32xf32>, vector<32x128xf32>, vector<1x128xf32> -> vector<1x128xf32>
    %28 = arith.addf %27, %22 : vector<1x128xf32>
    %29 = arith.negf %28 : vector<1x128xf32>
    %30 = math.exp %29 : vector<1x128xf32>
    %cst_26 = arith.constant 1.000000e+00 : f32
    %31 = vector.broadcast %cst_26 : f32 to vector<1x128xf32>
    %32 = arith.addf %31, %30 : vector<1x128xf32>
    %33 = arith.divf %31, %32 : vector<1x128xf32>
    %cst_27 = arith.constant 2.000000e+00 : f32
    %34 = vector.broadcast %cst_27 : f32 to vector<1x128xf32>
    %35 = arith.mulf %33, %34 : vector<1x128xf32>
    %c0_28 = arith.constant 0 : index
    %c0_29 = arith.constant 0 : index
    %36 = vector.load %arg3[%c0_28, %c0_29] : memref<8x128xf32, #tpu.memory_space<vmem>>, vector<8x128xf32>
    %37 = vector.broadcast %17 : vector<1x128xf32> to vector<8x128xf32>
    %38 = arith.mulf %36, %37 : vector<8x128xf32>
    %c0_30 = arith.constant 0 : index
    %c0_31 = arith.constant 0 : index
    %39 = vector.load %arg12[%c0_30, %c0_31] : memref<8x128xf32, #tpu.memory_space<vmem>>, vector<8x128xf32>
    tpu.vector_store %arg12[%c0_30, %c0_31], %38 {strides = array<i32>} : memref<8x128xf32, #tpu.memory_space<vmem>>, vector<8x128xf32>,
    %40 = vector.broadcast %35 : vector<1x128xf32> to vector<8x128xf32>
    %41 = arith.mulf %36, %40 : vector<8x128xf32>
    %c0_32 = arith.constant 0 : index
    %c0_33 = arith.constant 0 : index
    %42 = vector.load %arg13[%c0_32, %c0_33] : memref<8x128xf32, #tpu.memory_space<vmem>>, vector<8x128xf32>
    tpu.vector_store %arg13[%c0_32, %c0_33], %41 {strides = array<i32>} : memref<8x128xf32, #tpu.memory_space<vmem>>, vector<8x128xf32>,
    return
  }
  func.func @transform_0(%arg0: i32) -> (i32, i32) {
    %c0_i32 = arith.constant 0 : i32
    %c0_i32_0 = arith.constant 0 : i32
    %c0_i32_1 = arith.constant 0 : i32
    return %c0_i32, %c0_i32_0 : i32, i32
  }
  func.func @transform_1(%arg0: i32) -> (i32, i32) {
    %c0_i32 = arith.constant 0 : i32
    %c0_i32_0 = arith.constant 0 : i32
    %c0_i32_1 = arith.constant 0 : i32
    return %c0_i32, %c0_i32_0 : i32, i32
  }
  func.func @transform_2(%arg0: i32) -> (i32, i32) {
    %c0_i32 = arith.constant 0 : i32
    %c0_i32_0 = arith.constant 0 : i32
    return %arg0, %c0_i32 : i32, i32
  }
  func.func @transform_3(%arg0: i32) -> (i32, i32) {
    %c0_i32 = arith.constant 0 : i32
    %c0_i32_0 = arith.constant 0 : i32
    %c0_i32_1 = arith.constant 0 : i32
    return %c0_i32, %c0_i32_0 : i32, i32
  }
  func.func @transform_4(%arg0: i32) -> (i32, i32) {
    %c0_i32 = arith.constant 0 : i32
    %c0_i32_0 = arith.constant 0 : i32
    %c0_i32_1 = arith.constant 0 : i32
    return %c0_i32, %c0_i32_0 : i32, i32
  }
  func.func @transform_5(%arg0: i32) -> (i32, i32) {
    %c0_i32 = arith.constant 0 : i32
    %c0_i32_0 = arith.constant 0 : i32
    %c0_i32_1 = arith.constant 0 : i32
    return %c0_i32, %c0_i32_0 : i32, i32
  }
  func.func @transform_6(%arg0: i32) -> (i32, i32) {
    %c0_i32 = arith.constant 0 : i32
    %c0_i32_0 = arith.constant 0 : i32
    %c0_i32_1 = arith.constant 0 : i32
    return %c0_i32, %c0_i32_0 : i32, i32
  }
  func.func @transform_7(%arg0: i32) -> (i32, i32) {
    %c0_i32 = arith.constant 0 : i32
    %c0_i32_0 = arith.constant 0 : i32
    %c0_i32_1 = arith.constant 0 : i32
    return %c0_i32, %c0_i32_0 : i32, i32
  }
  func.func @transform_8(%arg0: i32) -> (i32, i32) {
    %c0_i32 = arith.constant 0 : i32
    %c0_i32_0 = arith.constant 0 : i32
    %c0_i32_1 = arith.constant 0 : i32
    return %c0_i32, %c0_i32_0 : i32, i32
  }
  func.func @transform_9(%arg0: i32) -> (i32, i32) {
    %c0_i32 = arith.constant 0 : i32
    %c0_i32_0 = arith.constant 0 : i32
    %c0_i32_1 = arith.constant 0 : i32
    return %c0_i32, %c0_i32_0 : i32, i32
  }
  func.func @transform_10(%arg0: i32) -> (i32, i32) {
    %c0_i32 = arith.constant 0 : i32
    %c0_i32_0 = arith.constant 0 : i32
    %c0_i32_1 = arith.constant 0 : i32
    return %c0_i32, %c0_i32_0 : i32, i32
  }
  func.func @transform_11(%arg0: i32) -> (i32, i32) {
    %c0_i32 = arith.constant 0 : i32
    %c0_i32_0 = arith.constant 0 : i32
    return %arg0, %c0_i32 : i32, i32
  }
  func.func @transform_12(%arg0: i32) -> (i32, i32) {
    %c0_i32 = arith.constant 0 : i32
    %c0_i32_0 = arith.constant 0 : i32
    return %arg0, %c0_i32 : i32, i32
  }
}

</mosaic_0001>

<llo_original>
// kernel: tpu_custom_call.1
$region0: #{tpu_custom_call.1}
  #allocation0 [shape = 'u32[]', space=smem, size = 0x4, offset = 0x4, fixed_abs, tag = 'smem constant byte address 0x4 - core index']
  #allocation1 [shape = 'u32[144,128]{1,0:T(1,128)}', space=vmem, size = 0x12000, scoped, tag = 'internal scratch']
  %s0 = inlined_call_operand.hbm [shape: f32[1,32], index: 0, kind: input, shape index: {}]
  %s1 = inlined_call_operand.vmem [shape: f32[1,32], index: 1, kind: input, shape index: {}]
  %s2 = inlined_call_operand.hbm [shape: f32[8,128], index: 2, kind: input, shape index: {}]
  %s3 = inlined_call_operand.hbm [shape: f32[32,32], index: 3, kind: input, shape index: {}]
  %s4 = inlined_call_operand.vmem [shape: f32[1,32], index: 4, kind: input, shape index: {}]
  %s5 = inlined_call_operand.hbm [shape: f32[32,128], index: 5, kind: input, shape index: {}]
  %s6 = inlined_call_operand.vmem [shape: f32[1,128], index: 6, kind: input, shape index: {}]
  %s7 = inlined_call_operand.hbm [shape: f32[32,32], index: 7, kind: input, shape index: {}]
  %s8 = inlined_call_operand.vmem [shape: f32[1,32], index: 8, kind: input, shape index: {}]
  %s9 = inlined_call_operand.hbm [shape: f32[32,128], index: 9, kind: input, shape index: {}]
  %s10 = inlined_call_operand.vmem [shape: f32[1,128], index: 10, kind: input, shape index: {}]
  %s11 = inlined_call_operand.hbm [shape: f32[8,128], index: 11, kind: output, shape index: {0}]
  %s12 = inlined_call_operand.hbm [shape: f32[8,128], index: 12, kind: output, shape index: {1}]
  %13 = xla_tuple %s11, %s12
  %s14 = sld [smem:[#allocation0]]
  $region86: #{tpu_custom_call.1} parent=0
    _
  %s16 = ssub.s32 1, %s14
  %s17 = scalar_select 0, %s16, %s14
  $region1: #{tpu_custom_call.1} parent=0
    #allocation2 [shape = 'u8[512]{0}', space=vmem, size = 0x400, scoped, tag = 'input window, operand 0, single buffered']
    #allocation3 [shape = 's32[1]{0}', space=sflag, size = 0x4, scoped, tag = 'scoped memory for tpu_custom_call.1']
    #allocation4 [shape = 's32[1]{0}', space=sflag, size = 0x4, scoped, tag = 'scoped memory for tpu_custom_call.1']
    #allocation5 [shape = 'u8[4096]{0}', space=vmem, size = 0x1000, scoped, tag = 'input window, operand 2, single buffered']
    #allocation6 [shape = 's32[1]{0}', space=sflag, size = 0x4, scoped, tag = 'scoped memory for tpu_custom_call.1']
    #allocation7 [shape = 'u8[16384]{0}', space=vmem, size = 0x4000, scoped, tag = 'input window, operand 3, single buffered']
    #allocation8 [shape = 'u8[16384]{0}', space=vmem, size = 0x4000, scoped, tag = 'input window, operand 5, single buffered']
    #allocation9 [shape = 's32[1]{0}', space=sflag, size = 0x4, scoped, tag = 'scoped memory for tpu_custom_call.1']
    #allocation10 [shape = 'u8[16384]{0}', space=vmem, size = 0x4000, scoped, tag = 'input window, operand 7, single buffered']
    #allocation11 [shape = 'u8[16384]{0}', space=vmem, size = 0x4000, scoped, tag = 'input window, operand 9, single buffered']
    #allocation12 [shape = 's32[1]{0}', space=sflag, size = 0x4, scoped, tag = 'scoped memory for tpu_custom_call.1']
    #allocation13 [shape = 'u8[4096]{0}', space=vmem, size = 0x1000, scoped, tag = 'output window, operand 0, single buffered']
    #allocation14 [shape = 'u8[4096]{0}', space=vmem, size = 0x1000, scoped, tag = 'output window, operand 1, single buffered']
    #allocation15 [shape = 's32[1]{0}', space=sflag, size = 0x4, scoped, tag = 'scoped memory for tpu_custom_call.1']
    %18 = vsyncpa [#allocation3], 0
    %19 = vsyncpa [#allocation6], 0
    %20 = vsyncpa [#allocation9], 0
    %21 = vsyncpa [#allocation12], 0
    %22 = vsyncpa [#allocation4], 0
    %23 = vsyncpa [#allocation15], 0
    // Predicated region
    $region2: #{tpu_custom_call.1} parent=1 // pred_check
      _
    $region3: #{tpu_custom_call.1} parent=1 // pred_check_branch
      %25 = sbr.rel (0) target = $region5
    $region4: #{tpu_custom_call.1} parent=1 // pred_region
      %s27 = ssub.s32 16, 16
      %28 = vsyncadd [#allocation3], %s27
      %s30 = sshll.u32 [#allocation2], 4
      %s31 = int_to_ptr.vmem [resolvable:$true] %s30
      %33 = dma.hbm_to_vmem [thread:$0]  %s0, 16, %s31, [#allocation3]
    $region5: #{tpu_custom_call.1} parent=1 // pred_fallthru
      _
    // Predicated region
    $region6: #{tpu_custom_call.1} parent=1 // pred_check
      _
    $region7: #{tpu_custom_call.1} parent=1 // pred_check_branch
      %35 = sbr.rel (0) target = $region9
    $region8: #{tpu_custom_call.1} parent=1 // pred_region
      _
    $region9: #{tpu_custom_call.1} parent=1 // pred_fallthru
      _
    // Predicated region
    $region10: #{tpu_custom_call.1} parent=1 // pred_check
      _
    $region11: #{tpu_custom_call.1} parent=1 // pred_check_branch
      %37 = sbr.rel (0) target = $region13
    $region12: #{tpu_custom_call.1} parent=1 // pred_region
      %s39 = ssub.s32 128, 128
      %40 = vsyncadd [#allocation6], %s39
      %s42 = sshll.u32 [#allocation5], 4
      %s43 = int_to_ptr.vmem [resolvable:$true] %s42
      %45 = dma.hbm_to_vmem [thread:$0]  %s2, 128, %s43, [#allocation6]
    $region13: #{tpu_custom_call.1} parent=1 // pred_fallthru
      _
    // Predicated region
    $region14: #{tpu_custom_call.1} parent=1 // pred_check
      _
    $region15: #{tpu_custom_call.1} parent=1 // pred_check_branch
      %47 = sbr.rel (0) target = $region17
    $region16: #{tpu_custom_call.1} parent=1 // pred_region
      %s49 = ssub.s32 512, 512
      %50 = vsyncadd [#allocation6], %s49
      %s51 = sshll.u32 [#allocation7], 4
      %s52 = int_to_ptr.vmem [resolvable:$true] %s51
      %57 = dma.hbm_to_vmem [thread:$0]  %s3, 512, %s52, [#allocation6], 128, 128, 8
    $region17: #{tpu_custom_call.1} parent=1 // pred_fallthru
      _
    // Predicated region
    $region18: #{tpu_custom_call.1} parent=1 // pred_check
      _
    $region19: #{tpu_custom_call.1} parent=1 // pred_check_branch
      %59 = sbr.rel (0) target = $region21
    $region20: #{tpu_custom_call.1} parent=1 // pred_region
      _
    $region21: #{tpu_custom_call.1} parent=1 // pred_fallthru
      _
    // Predicated region
    $region22: #{tpu_custom_call.1} parent=1 // pred_check
      _
    $region23: #{tpu_custom_call.1} parent=1 // pred_check_branch
      %61 = sbr.rel (0) target = $region25
    $region24: #{tpu_custom_call.1} parent=1 // pred_region
      %s63 = ssub.s32 512, 512
      %64 = vsyncadd [#allocation9], %s63
      %s65 = sshll.u32 [#allocation8], 4
      %s66 = int_to_ptr.vmem [resolvable:$true] %s65
      %71 = dma.hbm_to_vmem [thread:$0]  %s5, 512, %s66, [#allocation9], 128, 128, 8
    $region25: #{tpu_custom_call.1} parent=1 // pred_fallthru
      _
    // Predicated region
    $region26: #{tpu_custom_call.1} parent=1 // pred_check
      _
    $region27: #{tpu_custom_call.1} parent=1 // pred_check_branch
      %73 = sbr.rel (0) target = $region29
    $region28: #{tpu_custom_call.1} parent=1 // pred_region
      _
    $region29: #{tpu_custom_call.1} parent=1 // pred_fallthru
      _
    // Predicated region
    $region30: #{tpu_custom_call.1} parent=1 // pred_check
      _
    $region31: #{tpu_custom_call.1} parent=1 // pred_check_branch
      %75 = sbr.rel (0) target = $region33
    $region32: #{tpu_custom_call.1} parent=1 // pred_region
      %s77 = ssub.s32 512, 512
      %78 = vsyncadd [#allocation9], %s77
      %s79 = sshll.u32 [#allocation10], 4
      %s80 = int_to_ptr.vmem [resolvable:$true] %s79
      %85 = dma.hbm_to_vmem [thread:$0]  %s7, 512, %s80, [#allocation9], 128, 128, 8
    $region33: #{tpu_custom_call.1} parent=1 // pred_fallthru
      _
    // Predicated region
    $region34: #{tpu_custom_call.1} parent=1 // pred_check
      _
    $region35: #{tpu_custom_call.1} parent=1 // pred_check_branch
      %87 = sbr.rel (0) target = $region37
    $region36: #{tpu_custom_call.1} parent=1 // pred_region
      _
    $region37: #{tpu_custom_call.1} parent=1 // pred_fallthru
      _
    // Predicated region
    $region38: #{tpu_custom_call.1} parent=1 // pred_check
      _
    $region39: #{tpu_custom_call.1} parent=1 // pred_check_branch
      %89 = sbr.rel (0) target = $region41
    $region40: #{tpu_custom_call.1} parent=1 // pred_region
      %s91 = ssub.s32 512, 512
      %92 = vsyncadd [#allocation12], %s91
      %s93 = sshll.u32 [#allocation11], 4
      %s94 = int_to_ptr.vmem [resolvable:$true] %s93
      %99 = dma.hbm_to_vmem [thread:$0]  %s9, 512, %s94, [#allocation12], 128, 128, 8
    $region41: #{tpu_custom_call.1} parent=1 // pred_fallthru
      _
    // Predicated region
    $region42: #{tpu_custom_call.1} parent=1 // pred_check
      _
    $region43: #{tpu_custom_call.1} parent=1 // pred_check_branch
      %101 = sbr.rel (0) target = $region45
    $region44: #{tpu_custom_call.1} parent=1 // pred_region
      _
    $region45: #{tpu_custom_call.1} parent=1 // pred_fallthru
      _
    // Predicated region
    $region46: #{tpu_custom_call.1} parent=1 // pred_check
      _
    $region47: #{tpu_custom_call.1} parent=1 // pred_check_branch
      %103 = sbr.rel (0) target = $region49
    $region48: #{tpu_custom_call.1} parent=1 // pred_region
      %104 = dma.done [#allocation3], 16
    $region49: #{tpu_custom_call.1} parent=1 // pred_fallthru
      _
    // Predicated region
    $region50: #{tpu_custom_call.1} parent=1 // pred_check
      _
    $region51: #{tpu_custom_call.1} parent=1 // pred_check_branch
      %106 = sbr.rel (0) target = $region53
    $region52: #{tpu_custom_call.1} parent=1 // pred_region
      %107 = dma.done [#allocation6], 128
    $region53: #{tpu_custom_call.1} parent=1 // pred_fallthru
      _
    // Predicated region
    $region54: #{tpu_custom_call.1} parent=1 // pred_check
      _
    $region55: #{tpu_custom_call.1} parent=1 // pred_check_branch
      %109 = sbr.rel (0) target = $region57
    $region56: #{tpu_custom_call.1} parent=1 // pred_region
      %110 = dma.done [#allocation6], 512
    $region57: #{tpu_custom_call.1} parent=1 // pred_fallthru
      _
    // Predicated region
    $region58: #{tpu_custom_call.1} parent=1 // pred_check
      _
    $region59: #{tpu_custom_call.1} parent=1 // pred_check_branch
      %112 = sbr.rel (0) target = $region61
    $region60: #{tpu_custom_call.1} parent=1 // pred_region
      %113 = dma.done [#allocation9], 512
    $region61: #{tpu_custom_call.1} parent=1 // pred_fallthru
      _
    // Predicated region
    $region62: #{tpu_custom_call.1} parent=1 // pred_check
      _
    $region63: #{tpu_custom_call.1} parent=1 // pred_check_branch
      %115 = sbr.rel (0) target = $region65
    $region64: #{tpu_custom_call.1} parent=1 // pred_region
      %116 = dma.done [#allocation9], 512
    $region65: #{tpu_custom_call.1} parent=1 // pred_fallthru
      _
    // Predicated region
    $region66: #{tpu_custom_call.1} parent=1 // pred_check
      _
    $region67: #{tpu_custom_call.1} parent=1 // pred_check_branch
      %118 = sbr.rel (0) target = $region69
    $region68: #{tpu_custom_call.1} parent=1 // pred_region
      %119 = dma.done [#allocation12], 512
    $region69: #{tpu_custom_call.1} parent=1 // pred_fallthru
      _
    %v120 = vld [vmem:[#allocation2] sm:$0x1]
    %v121 = vld [vmem:[#allocation7] sm:$0xff]
    %v122 = vld [vmem:[#allocation7 + $0x8] sm:$0xff]
    %v123 = vld [vmem:[#allocation7 + $0x10] sm:$0xff]
    %v124 = vld [vmem:[#allocation7 + $0x18] sm:$0xff]
    %v125 = vld [vmem:[%s4] sm:$0x1]
    %v126 = vld [vmem:[#allocation8] sm:$0xff]
    %v127 = vld [vmem:[#allocation8 + $0x8] sm:$0xff]
    %v128 = vld [vmem:[#allocation8 + $0x10] sm:$0xff]
    %v129 = vld [vmem:[#allocation8 + $0x18] sm:$0xff]
    %v130 = vld [vmem:[%s6] sm:$0x1]
    %vm131 = vcmask 261120
    %v133 = vsel %vm131, %v120, 0
    %135 = vmatprep.subr.mxu0 0.0
    %136 = vmatpush1.msra.mxu0 0.0
    %137 = vmatprep.subr.mxu0 0.0
    %138 = vmatpush1.msra.mxu0 0.0
    %139 = vmatprep.subr.mxu0 0.0
    %140 = vmatpush1.msra.mxu0 0.0
    %141 = vmatprep.subr.mxu0 0.0
    %142 = vmatpush1.msra.mxu0 0.0
    %143 = vmatprep.subr.mxu0 0.0
    %144 = vmatpush1.msra.mxu0 0.0
    %145 = vmatprep.subr.mxu0 0.0
    %146 = vmatpush1.msra.mxu0 0.0
    %147 = vmatprep.subr.mxu0 0.0
    %148 = vmatpush1.msra.mxu0 0.0
    %149 = vmatprep.subr.mxu0 0.0
    %150 = vmatpush1.msra.mxu0 0.0
    %151 = vmatprep.subr.mxu0 0.0
    %152 = vmatpush1.msra.mxu0 0.0
    %153 = vmatprep.subr.mxu0 0.0
    %154 = vmatpush1.msra.mxu0 0.0
    %155 = vmatprep.subr.mxu0 0.0
    %156 = vmatpush1.msra.mxu0 0.0
    %157 = vmatprep.subr.mxu0 0.0
    %158 = vmatpush1.msra.mxu0 0.0
    %159 = vmatprep.subr.mxu0 0.0
    %160 = vmatpush1.msra.mxu0 %v124
    %161 = vmatprep.subr.mxu0 0.0
    %162 = vmatpush1.msra.mxu0 %v123
    %163 = vmatprep.subr.mxu0 0.0
    %164 = vmatpush1.msra.mxu0 %v122
    %165 = vmatprep.subr.mxu0 0.0
    %166 = vmatpush1.msra.mxu0 %v121
    %167 = vmatprep.subr.mxu0 0.0
    %168 = vmatpush2.msra.mxu0 0.0
    %169 = vmatprep.subr.mxu0 0.0
    %170 = vmatpush2.msra.mxu0 0.0
    %171 = vmatprep.subr.mxu0 0.0
    %172 = vmatpush2.msra.mxu0 0.0
    %173 = vmatprep.subr.mxu0 0.0
    %174 = vmatpush2.msra.mxu0 0.0
    %175 = vmatprep.subr.mxu0 0.0
    %176 = vmatpush2.msra.mxu0 0.0
    %177 = vmatprep.subr.mxu0 0.0
    %178 = vmatpush2.msra.mxu0 0.0
    %179 = vmatprep.subr.mxu0 0.0
    %180 = vmatpush2.msra.mxu0 0.0
    %181 = vmatprep.subr.mxu0 0.0
    %182 = vmatpush2.msra.mxu0 0.0
    %183 = vmatprep.subr.mxu0 0.0
    %184 = vmatpush2.msra.mxu0 0.0
    %185 = vmatprep.subr.mxu0 0.0
    %186 = vmatpush2.msra.mxu0 0.0
    %187 = vmatprep.subr.mxu0 0.0
    %188 = vmatpush2.msra.mxu0 0.0
    %189 = vmatprep.subr.mxu0 0.0
    %190 = vmatpush2.msra.mxu0 0.0
    %191 = vmatprep.subr.mxu0 0.0
    %192 = vmatpush2.msra.mxu0 0.0
    %193 = vmatprep.subr.mxu0 0.0
    %194 = vmatpush2.msra.mxu0 0.0
    %195 = vmatprep.subr.mxu0 0.0
    %196 = vmatpush2.msra.mxu0 0.0
    %197 = vmatprep.subr.mxu0 0.0
    %198 = vmatpush2.msra.mxu0 0.0
    %199 = vmatprep.mubr.f32.mxu0 0.0
    %200 = vmatmul.mubr.f32.gmra.mxu0 %v133
    %v201 = vpop.f32.mrf.mxu0
    %v202 = vadd.f32 %v125, %v201
    %v203 = vpop.f32.mrf.mxu0
    %204 = vdwg.mxu0
    %v205 = vmax.f32 %v202, 0.0
    %v207 = vsel %vm131, %v205, 0
    %209 = vmatprep.subr.mxu0 0.0
    %210 = vmatpush1.msra.mxu0 0.0
    %211 = vmatprep.subr.mxu0 0.0
    %212 = vmatpush1.msra.mxu0 0.0
    %213 = vmatprep.subr.mxu0 0.0
    %214 = vmatpush1.msra.mxu0 0.0
    %215 = vmatprep.subr.mxu0 0.0
    %216 = vmatpush1.msra.mxu0 0.0
    %217 = vmatprep.subr.mxu0 0.0
    %218 = vmatpush1.msra.mxu0 0.0
    %219 = vmatprep.subr.mxu0 0.0
    %220 = vmatpush1.msra.mxu0 0.0
    %221 = vmatprep.subr.mxu0 0.0
    %222 = vmatpush1.msra.mxu0 0.0
    %223 = vmatprep.subr.mxu0 0.0
    %224 = vmatpush1.msra.mxu0 0.0
    %225 = vmatprep.subr.mxu0 0.0
    %226 = vmatpush1.msra.mxu0 0.0
    %227 = vmatprep.subr.mxu0 0.0
    %228 = vmatpush1.msra.mxu0 0.0
    %229 = vmatprep.subr.mxu0 0.0
    %230 = vmatpush1.msra.mxu0 0.0
    %231 = vmatprep.subr.mxu0 0.0
    %232 = vmatpush1.msra.mxu0 0.0
    %233 = vmatprep.subr.mxu0 0.0
    %234 = vmatpush1.msra.mxu0 %v129
    %235 = vmatprep.subr.mxu0 0.0
    %236 = vmatpush1.msra.mxu0 %v128
    %237 = vmatprep.subr.mxu0 0.0
    %238 = vmatpush1.msra.mxu0 %v127
    %239 = vmatprep.subr.mxu0 0.0
    %240 = vmatpush1.msra.mxu0 %v126
    %241 = vmatprep.subr.mxu0 0.0
    %242 = vmatpush2.msra.mxu0 0.0
    %243 = vmatprep.subr.mxu0 0.0
    %244 = vmatpush2.msra.mxu0 0.0
    %245 = vmatprep.subr.mxu0 0.0
    %246 = vmatpush2.msra.mxu0 0.0
    %247 = vmatprep.subr.mxu0 0.0
    %248 = vmatpush2.msra.mxu0 0.0
    %249 = vmatprep.subr.mxu0 0.0
    %250 = vmatpush2.msra.mxu0 0.0
    %251 = vmatprep.subr.mxu0 0.0
    %252 = vmatpush2.msra.mxu0 0.0
    %253 = vmatprep.subr.mxu0 0.0
    %254 = vmatpush2.msra.mxu0 0.0
    %255 = vmatprep.subr.mxu0 0.0
    %256 = vmatpush2.msra.mxu0 0.0
    %257 = vmatprep.subr.mxu0 0.0
    %258 = vmatpush2.msra.mxu0 0.0
    %259 = vmatprep.subr.mxu0 0.0
    %260 = vmatpush2.msra.mxu0 0.0
    %261 = vmatprep.subr.mxu0 0.0
    %262 = vmatpush2.msra.mxu0 0.0
    %263 = vmatprep.subr.mxu0 0.0
    %264 = vmatpush2.msra.mxu0 0.0
    %265 = vmatprep.subr.mxu0 0.0
    %266 = vmatpush2.msra.mxu0 0.0
    %267 = vmatprep.subr.mxu0 0.0
    %268 = vmatpush2.msra.mxu0 0.0
    %269 = vmatprep.subr.mxu0 0.0
    %270 = vmatpush2.msra.mxu0 0.0
    %271 = vmatprep.subr.mxu0 0.0
    %272 = vmatpush2.msra.mxu0 0.0
    %273 = vmatprep.mubr.f32.mxu0 0.0
    %274 = vmatmul.mubr.f32.gmra.mxu0 %v207
    %v275 = vpop.f32.mrf.mxu0
    %v276 = vadd.f32 %v130, %v275
    %v277 = vpop.f32.mrf.mxu0
    %278 = vdwg.mxu0
    %v279 = vxor.u32 %v276, 2147483648
    %v280 = vmul.f32 %v279, 1.442695
    %v281 = vpow.pop %v280
    %v282 = vadd.f32 %v281, 1.0
    %v283 = vrcp.pop %v282
    %v284 = vmul.f32 1.0, %v283
    %v285 = vmul.f32 %v284, 2.0
    %v286 = vld [vmem:[%s1] sm:$0x1]
    %v287 = vld [vmem:[#allocation10] sm:$0xff]
    %v288 = vld [vmem:[#allocation10 + $0x8] sm:$0xff]
    %v289 = vld [vmem:[#allocation10 + $0x10] sm:$0xff]
    %v290 = vld [vmem:[#allocation10 + $0x18] sm:$0xff]
    %v291 = vld [vmem:[%s8] sm:$0x1]
    %v292 = vld [vmem:[#allocation11] sm:$0xff]
    %v293 = vld [vmem:[#allocation11 + $0x8] sm:$0xff]
    %v294 = vld [vmem:[#allocation11 + $0x10] sm:$0xff]
    %v295 = vld [vmem:[#allocation11 + $0x18] sm:$0xff]
    %v296 = vld [vmem:[%s10] sm:$0x1]
    %v298 = vsel %vm131, %v286, 0
    %300 = vmatprep.subr.mxu0 0.0
    %301 = vmatpush1.msra.mxu0 0.0
    %302 = vmatprep.subr.mxu0 0.0
    %303 = vmatpush1.msra.mxu0 0.0
    %304 = vmatprep.subr.mxu0 0.0
    %305 = vmatpush1.msra.mxu0 0.0
    %306 = vmatprep.subr.mxu0 0.0
    %307 = vmatpush1.msra.mxu0 0.0
    %308 = vmatprep.subr.mxu0 0.0
    %309 = vmatpush1.msra.mxu0 0.0
    %310 = vmatprep.subr.mxu0 0.0
    %311 = vmatpush1.msra.mxu0 0.0
    %312 = vmatprep.subr.mxu0 0.0
    %313 = vmatpush1.msra.mxu0 0.0
    %314 = vmatprep.subr.mxu0 0.0
    %315 = vmatpush1.msra.mxu0 0.0
    %316 = vmatprep.subr.mxu0 0.0
    %317 = vmatpush1.msra.mxu0 0.0
    %318 = vmatprep.subr.mxu0 0.0
    %319 = vmatpush1.msra.mxu0 0.0
    %320 = vmatprep.subr.mxu0 0.0
    %321 = vmatpush1.msra.mxu0 0.0
    %322 = vmatprep.subr.mxu0 0.0
    %323 = vmatpush1.msra.mxu0 0.0
    %324 = vmatprep.subr.mxu0 0.0
    %325 = vmatpush1.msra.mxu0 %v290
    %326 = vmatprep.subr.mxu0 0.0
    %327 = vmatpush1.msra.mxu0 %v289
    %328 = vmatprep.subr.mxu0 0.0
    %329 = vmatpush1.msra.mxu0 %v288
    %330 = vmatprep.subr.mxu0 0.0
    %331 = vmatpush1.msra.mxu0 %v287
    %332 = vmatprep.subr.mxu0 0.0
    %333 = vmatpush2.msra.mxu0 0.0
    %334 = vmatprep.subr.mxu0 0.0
    %335 = vmatpush2.msra.mxu0 0.0
    %336 = vmatprep.subr.mxu0 0.0
    %337 = vmatpush2.msra.mxu0 0.0
    %338 = vmatprep.subr.mxu0 0.0
    %339 = vmatpush2.msra.mxu0 0.0
    %340 = vmatprep.subr.mxu0 0.0
    %341 = vmatpush2.msra.mxu0 0.0
    %342 = vmatprep.subr.mxu0 0.0
    %343 = vmatpush2.msra.mxu0 0.0
    %344 = vmatprep.subr.mxu0 0.0
    %345 = vmatpush2.msra.mxu0 0.0
    %346 = vmatprep.subr.mxu0 0.0
    %347 = vmatpush2.msra.mxu0 0.0
    %348 = vmatprep.subr.mxu0 0.0
    %349 = vmatpush2.msra.mxu0 0.0
    %350 = vmatprep.subr.mxu0 0.0
    %351 = vmatpush2.msra.mxu0 0.0
    %352 = vmatprep.subr.mxu0 0.0
    %353 = vmatpush2.msra.mxu0 0.0
    %354 = vmatprep.subr.mxu0 0.0
    %355 = vmatpush2.msra.mxu0 0.0
    %356 = vmatprep.subr.mxu0 0.0
    %357 = vmatpush2.msra.mxu0 0.0
    %358 = vmatprep.subr.mxu0 0.0
    %359 = vmatpush2.msra.mxu0 0.0
    %360 = vmatprep.subr.mxu0 0.0
    %361 = vmatpush2.msra.mxu0 0.0
    %362 = vmatprep.subr.mxu0 0.0
    %363 = vmatpush2.msra.mxu0 0.0
    %364 = vmatprep.mubr.f32.mxu0 0.0
    %365 = vmatmul.mubr.f32.gmra.mxu0 %v298
    %v366 = vpop.f32.mrf.mxu0
    %v367 = vadd.f32 %v291, %v366
    %v368 = vpop.f32.mrf.mxu0
    %369 = vdwg.mxu0
    %v370 = vmax.f32 %v367, 0.0
    %v372 = vsel %vm131, %v370, 0
    %374 = vmatprep.subr.mxu0 0.0
    %375 = vmatpush1.msra.mxu0 0.0
    %376 = vmatprep.subr.mxu0 0.0
    %377 = vmatpush1.msra.mxu0 0.0
    %378 = vmatprep.subr.mxu0 0.0
    %379 = vmatpush1.msra.mxu0 0.0
    %380 = vmatprep.subr.mxu0 0.0
    %381 = vmatpush1.msra.mxu0 0.0
    %382 = vmatprep.subr.mxu0 0.0
    %383 = vmatpush1.msra.mxu0 0.0
    %384 = vmatprep.subr.mxu0 0.0
    %385 = vmatpush1.msra.mxu0 0.0
    %386 = vmatprep.subr.mxu0 0.0
    %387 = vmatpush1.msra.mxu0 0.0
    %388 = vmatprep.subr.mxu0 0.0
    %389 = vmatpush1.msra.mxu0 0.0
    %390 = vmatprep.subr.mxu0 0.0
    %391 = vmatpush1.msra.mxu0 0.0
    %392 = vmatprep.subr.mxu0 0.0
    %393 = vmatpush1.msra.mxu0 0.0
    %394 = vmatprep.subr.mxu0 0.0
    %395 = vmatpush1.msra.mxu0 0.0
    %396 = vmatprep.subr.mxu0 0.0
    %397 = vmatpush1.msra.mxu0 0.0
    %398 = vmatprep.subr.mxu0 0.0
    %399 = vmatpush1.msra.mxu0 %v295
    %400 = vmatprep.subr.mxu0 0.0
    %401 = vmatpush1.msra.mxu0 %v294
    %402 = vmatprep.subr.mxu0 0.0
    %403 = vmatpush1.msra.mxu0 %v293
    %404 = vmatprep.subr.mxu0 0.0
    %405 = vmatpush1.msra.mxu0 %v292
    %406 = vmatprep.subr.mxu0 0.0
    %407 = vmatpush2.msra.mxu0 0.0
    %408 = vmatprep.subr.mxu0 0.0
    %409 = vmatpush2.msra.mxu0 0.0
    %410 = vmatprep.subr.mxu0 0.0
    %411 = vmatpush2.msra.mxu0 0.0
    %412 = vmatprep.subr.mxu0 0.0
    %413 = vmatpush2.msra.mxu0 0.0
    %414 = vmatprep.subr.mxu0 0.0
    %415 = vmatpush2.msra.mxu0 0.0
    %416 = vmatprep.subr.mxu0 0.0
    %417 = vmatpush2.msra.mxu0 0.0
    %418 = vmatprep.subr.mxu0 0.0
    %419 = vmatpush2.msra.mxu0 0.0
    %420 = vmatprep.subr.mxu0 0.0
    %421 = vmatpush2.msra.mxu0 0.0
    %422 = vmatprep.subr.mxu0 0.0
    %423 = vmatpush2.msra.mxu0 0.0
    %424 = vmatprep.subr.mxu0 0.0
    %425 = vmatpush2.msra.mxu0 0.0
    %426 = vmatprep.subr.mxu0 0.0
    %427 = vmatpush2.msra.mxu0 0.0
    %428 = vmatprep.subr.mxu0 0.0
    %429 = vmatpush2.msra.mxu0 0.0
    %430 = vmatprep.subr.mxu0 0.0
    %431 = vmatpush2.msra.mxu0 0.0
    %432 = vmatprep.subr.mxu0 0.0
    %433 = vmatpush2.msra.mxu0 0.0
    %434 = vmatprep.subr.mxu0 0.0
    %435 = vmatpush2.msra.mxu0 0.0
    %436 = vmatprep.subr.mxu0 0.0
    %437 = vmatpush2.msra.mxu0 0.0
    %438 = vmatprep.mubr.f32.mxu0 0.0
    %439 = vmatmul.mubr.f32.gmra.mxu0 %v372
    %v440 = vpop.f32.mrf.mxu0
    %v441 = vadd.f32 %v296, %v440
    %v442 = vpop.f32.mrf.mxu0
    %443 = vdwg.mxu0
    %v444 = vxor.u32 %v441, 2147483648
    %v445 = vmul.f32 %v444, 1.442695
    %v446 = vpow.pop %v445
    %v447 = vadd.f32 %v446, 1.0
    %v448 = vrcp.pop %v447
    %v449 = vmul.f32 1.0, %v448
    %v450 = vmul.f32 %v449, 2.0
    %v451 = vld [vmem:[#allocation5] sm:$0xff]
    %v452 = vlaneseq
    %v453 = vshrl.u32 %v452, 7
    %v454 = vsub.s32 0, %v453
    %v455 = vrot.slane %v285, %v454
    %v456 = vmul.f32 %v451, %v455
    %457 = vst [vmem:[#allocation13] sm:$0xff] %v456
    %v458 = vlaneseq
    %v459 = vshrl.u32 %v458, 7
    %v460 = vsub.s32 0, %v459
    %v461 = vrot.slane %v450, %v460
    %v462 = vmul.f32 %v451, %v461
    %463 = vst [vmem:[#allocation14] sm:$0xff] %v462
    // Predicated region
    $region70: #{tpu_custom_call.1} parent=1 // pred_check
      _
    $region71: #{tpu_custom_call.1} parent=1 // pred_check_branch
      %465 = sbr.rel (0) target = $region73
    $region72: #{tpu_custom_call.1} parent=1 // pred_region
      %s467 = ssub.s32 128, 128
      %468 = vsyncadd [#allocation4], %s467
      %s470 = sshll.u32 [#allocation13], 4
      %s471 = int_to_ptr.vmem [resolvable:$true] %s470
      %473 = dma.vmem_to_hbm [thread:$0]  %s471, 128, %s11, [#allocation4]
    $region73: #{tpu_custom_call.1} parent=1 // pred_fallthru
      _
    // Predicated region
    $region74: #{tpu_custom_call.1} parent=1 // pred_check
      _
    $region75: #{tpu_custom_call.1} parent=1 // pred_check_branch
      %475 = sbr.rel (0) target = $region77
    $region76: #{tpu_custom_call.1} parent=1 // pred_region
      %s477 = ssub.s32 128, 128
      %478 = vsyncadd [#allocation15], %s477
      %s480 = sshll.u32 [#allocation14], 4
      %s481 = int_to_ptr.vmem [resolvable:$true] %s480
      %483 = dma.vmem_to_hbm [thread:$0]  %s481, 128, %s12, [#allocation15]
    $region77: #{tpu_custom_call.1} parent=1 // pred_fallthru
      _
    // Predicated region
    $region78: #{tpu_custom_call.1} parent=1 // pred_check
      _
    $region79: #{tpu_custom_call.1} parent=1 // pred_check_branch
      %485 = sbr.rel (0) target = $region81
    $region80: #{tpu_custom_call.1} parent=1 // pred_region
      %486 = dma.done [#allocation4], 128
    $region81: #{tpu_custom_call.1} parent=1 // pred_fallthru
      _
    // Predicated region
    $region82: #{tpu_custom_call.1} parent=1 // pred_check
      _
    $region83: #{tpu_custom_call.1} parent=1 // pred_check_branch
      %488 = sbr.rel (0) target = $region85
    $region84: #{tpu_custom_call.1} parent=1 // pred_region
      %489 = dma.done [#allocation15], 128
    $region85: #{tpu_custom_call.1} parent=1 // pred_fallthru
      _
    %490 = vsyncpa [#allocation3], 1
    %491 = vsyncpa [#allocation6], 1
    %492 = vsyncpa [#allocation9], 1
    %493 = vsyncpa [#allocation12], 1
    %494 = vsyncpa [#allocation4], 1
    %495 = vsyncpa [#allocation15], 1

</llo_original>
